<compile_context>
chip_gen: v7x
topology: tpu7x:2x2x1
jax: 0.10.0
libtpu: 0.0.40
codegen_flags: <defaults>
</compile_context>

<pallas_src>
import functools

import jax
import jax.numpy as jnp
from jax.experimental import pallas as pl
from jax.experimental.pallas import tpu as pltpu

NEG_INF = -1.0e30  # Python float -> jaxpr literal (NOT a captured jnp constant)


def _round_down(x, m):
    return (x // m) * m


# ---------------------------------------------------------------------------
# Pallas kernel
# ---------------------------------------------------------------------------
def _gb_loss_kernel(logits_ref, labels_ref, out_ref, *, k, batch_size,
                    tile_rows, strip_rows):
    i = pl.program_id(0)
    C = logits_ref.shape[1]
    n_strips = tile_rows // strip_rows
    row_base = i * tile_rows

    def strip_loss_sum(r0):
        # Native-dtype block in VMEM; up-cast per strip.
        logits = logits_ref[pl.ds(r0, strip_rows), :].astype(jnp.float32)
        labels = labels_ref[pl.ds(r0, strip_rows), :]                 # (rs, 1)

        col = jax.lax.broadcasted_iota(jnp.int32, (strip_rows, C), 1)
        is_label = col == labels                                      # (rs, C)

        # True-class logit per row.
        l_y = jnp.max(jnp.where(is_label, logits, NEG_INF),
                      axis=1, keepdims=True)                          # (rs, 1)
        # Non-label logits.
        neg = jnp.where(is_label, NEG_INF, logits)

        # Reuse the first cross-lane max both as the LSE shift and as pick #1.
        v = jnp.max(neg, axis=1, keepdims=True)                       # top-1
        m = jnp.maximum(l_y, v)
        s = jnp.exp(l_y - m) + jnp.exp(v - m)

        cur = neg
        for _ in range(k - 1):                     # small static k -> unrolled
            # Knock out only the FIRST occurrence of the current max
            # (tie-safe: duplicates are taken with multiplicity, like topk).
            first = jnp.min(jnp.where(cur == v, col, C),
                            axis=1, keepdims=True)
            cur = jnp.where(col == first, NEG_INF, cur)
            v = jnp.max(cur, axis=1, keepdims=True)
            s = s + jnp.exp(v - m)

        loss = jnp.log(s) + m - l_y                                   # (rs, 1)

        # Mask rows beyond the real batch (ragged last tile) -- keep as a
        # select so garbage (even nan/inf) never propagates.
        row = (jax.lax.broadcasted_iota(jnp.int32, (strip_rows, 1), 0)
               + row_base + r0)
        loss = jnp.where(row < batch_size, loss, 0.0)
        return jnp.sum(loss, keepdims=True)                           # (1, 1)

    # Strip-mine: big DMA tile, bounded per-strip f32 working set.
    total = strip_loss_sum(0)
    if n_strips > 1:
        def body(sidx, acc):
            r0 = pl.multiple_of(sidx * strip_rows, strip_rows)
            return acc + strip_loss_sum(r0)
        total = jax.lax.fori_loop(1, n_strips, body, total)

    # Per-tile partial sum, broadcast to a full lane-dense (8,128) tile so the
    # store is an unmasked vst and the grid axis can stay "parallel".
    out_ref[...] = jnp.broadcast_to(total, out_ref.shape)


# ---------------------------------------------------------------------------
# Tiling / wrapper
# ---------------------------------------------------------------------------
def _choose_tiling(B, C, in_itemsize):
    """Returns (tile_rows, strip_rows); strip_rows divides tile_rows."""
    if B < 8:
        return B, B  # block dim == full array dim is always legal
    # strip rows: keep ~6 live (rs, C) f32 temporaries under ~2 MiB
    rs_cap = max(8, _round_down((2 << 20) // max(1, 6 * C * 4), 8))
    rs = max(8, min(512, rs_cap, _round_down(B, 8)))
    # DMA tile rows: ~4 MiB of native-dtype logits per block, multiple of rs
    dma_cap = _round_down((4 << 20) // max(1, C * in_itemsize), rs)
    tb = max(rs, min(_round_down(B, rs), dma_cap, _round_down(4096, rs)))
    return tb, rs


def gradient_boosting_loss(logits, labels, k=4):
    """logits: (B, C) float (any float dtype), labels: (B,) int -> scalar f32."""
    B, C = logits.shape
    assert C - 1 >= k, "need at least k non-label classes"

    in_itemsize = jnp.dtype(logits.dtype).itemsize
    tb, rs = _choose_tiling(B, C, in_itemsize)
    num_tiles = -(-B // tb)

    # Only the tiny label vector is reshaped/cast; logits go in untouched.
    labels2d = labels.astype(jnp.int32).reshape(B, 1)

    # VMEM budget: 2 pipeline buffers per input block + strip working set.
    try:
        vmem_cap = int(pltpu.get_tpu_info().vmem_capacity_bytes)
    except Exception:
        vmem_cap = 64 << 20  # conservative (v7x physical per-TC VMEM)
    block_bytes = tb * C * in_itemsize + tb * 4
    work_bytes = 8 * rs * C * 4
    needed = 2 * block_bytes + work_bytes + 2 * 8 * 128 * 4 + (2 << 20)
    vmem_limit = int(min(max(needed, 16 << 20), (vmem_cap * 3) // 4))

    partials = pl.pallas_call(
        functools.partial(_gb_loss_kernel, k=k, batch_size=B,
                          tile_rows=tb, strip_rows=rs),
        out_shape=jax.ShapeDtypeStruct((8 * num_tiles, 128), jnp.float32),
        grid=(num_tiles,),
        in_specs=[
            pl.BlockSpec((tb, C), lambda i: (i, 0)),   # native dtype, full C
            pl.BlockSpec((tb, 1), lambda i: (i, 0)),
        ],
        out_specs=pl.BlockSpec((8, 128), lambda i: (i, 0)),
        compiler_params=pltpu.CompilerParams(
            dimension_semantics=("parallel",),          # batch tiles -> both TCs on v7x
            vmem_limit_bytes=vmem_limit),
    )(logits, labels2d)

    # Sum the per-tile partials and divide by B exactly once.
    return jnp.sum(partials[::8, 0]) / B


# ---------------------------------------------------------------------------
# Pure-JAX reference (matches the PyTorch module)
# ---------------------------------------------------------------------------
def _reference_loss(logits, labels, k):
    B, C = logits.shape
    onehot = jnp.arange(C)[None, :] == labels[:, None]
    neg = jnp.where(onehot, -jnp.inf, logits)
    topk, _ = jax.lax.top_k(neg, k)
    l_y = jnp.take_along_axis(logits, labels[:, None], axis=1)[:, 0]
    num = jnp.exp(l_y)
    den = num + jnp.sum(jnp.exp(topk), axis=1)
    return jnp.mean(-jnp.log(num / den))


# ---------------------------------------------------------------------------
if __name__ == "__main__":
    key = jax.random.PRNGKey(0)

    def run_case(B, C, K, dtype):
        kk = jax.random.fold_in(key, B * 1000 + C)
        k1, k2 = jax.random.split(kk)
        logits = jax.random.normal(k1, (B, C), jnp.float32).astype(dtype)
        labels = jax.random.randint(k2, (B,), 0, C, dtype=jnp.int32)

        out = jax.block_until_ready(gradient_boosting_loss(logits, labels, k=K))
        ref = _reference_loss(logits.astype(jnp.float32), labels, K)

        assert bool(jnp.isfinite(out)), (B, C, K, str(dtype))
        tol = 5e-4 * max(1.0, abs(float(ref)))
        assert abs(float(out) - float(ref)) < tol, \
            (B, C, K, str(dtype), float(out), float(ref))

    # primary small case from the module spec (k=4)
    run_case(8, 32, 4, jnp.float32)
    # ragged batch (not a multiple of the row tile), two grid tiles
    run_case(50, 40, 3, jnp.float32)
    # native bf16 input (cast to f32 inside the kernel), multi-strip tile
    run_case(320, 1024, 6, jnp.bfloat16)

    print("KERNEL_OK")
</pallas_src>

<mosaic_0001>
module attributes {stable_mosaic.version = 11 : i64} {
  func.func @_gb_loss_kernel(%arg0: i32, %arg1: memref<8x32xf32, #tpu.memory_space<vmem>>, %arg2: memref<8x1xi32, #tpu.memory_space<vmem>>, %arg3: memref<8x128xf32, #tpu.memory_space<vmem>>) attributes {dimension_semantics = [#tpu.dimension_semantics<parallel>], iteration_bounds = array<i64: 1>, scalar_prefetch = 0 : i64, scratch_operands = 0 : i64, tpu.core_type = #tpu.core_type<tc>, window_params = [{transform_indices = @transform_0, window_bounds = array<i64: 8, 32>}, {transform_indices = @transform_1, window_bounds = array<i64: 8, 1>}, {transform_indices = @transform_2, window_bounds = array<i64: 8, 128>}]} {
    %c8_i32 = arith.constant 8 : i32
    %0 = arith.muli %arg0, %c8_i32 : i32
    %c0 = arith.constant 0 : index
    %c0_0 = arith.constant 0 : index
    %1 = vector.load %arg1[%c0, %c0_0] : memref<8x32xf32, #tpu.memory_space<vmem>>, vector<8x32xf32>
    %c0_1 = arith.constant 0 : index
    %c0_2 = arith.constant 0 : index
    %2 = vector.load %arg2[%c0_1, %c0_2] : memref<8x1xi32, #tpu.memory_space<vmem>>, vector<8x1xi32>
    %3 = tpu.iota {dimensions = array<i32: 1>} : vector<8x32xi32>
    %4 = vector.broadcast %2 : vector<8x1xi32> to vector<8x32xi32>
    %5 = arith.cmpi eq, %3, %4 : vector<8x32xi32>
    %cst = arith.constant -1.000000e+30 : f32
    %6 = vector.broadcast %cst : f32 to vector<8x32xf32>
    %7 = arith.select %5, %1, %6 : vector<8x32xi1>, vector<8x32xf32>
    %cst_3 = arith.constant dense<0xFF800000> : vector<8xf32>
    %8 = vector.multi_reduction <maximumf>, %7, %cst_3 [1] : vector<8x32xf32> to vector<8xf32>
    %9 = vector.shape_cast %8 : vector<8xf32> to vector<8x1xf32>
    %cst_4 = arith.constant -1.000000e+30 : f32
    %10 = vector.broadcast %cst_4 : f32 to vector<8x32xf32>
    %11 = arith.select %5, %10, %1 : vector<8x32xi1>, vector<8x32xf32>
    %cst_5 = arith.constant dense<0xFF800000> : vector<8xf32>
    %12 = vector.multi_reduction <maximumf>, %11, %cst_5 [1] : vector<8x32xf32> to vector<8xf32>
    %13 = vector.shape_cast %12 : vector<8xf32> to vector<8x1xf32>
    %14 = arith.maximumf %9, %13 : vector<8x1xf32>
    %15 = arith.subf %9, %14 : vector<8x1xf32>
    %16 = math.exp %15 : vector<8x1xf32>
    %17 = arith.subf %13, %14 : vector<8x1xf32>
    %18 = math.exp %17 : vector<8x1xf32>
    %19 = arith.addf %16, %18 : vector<8x1xf32>
    %20 = vector.broadcast %13 : vector<8x1xf32> to vector<8x32xf32>
    %21 = arith.cmpf oeq, %11, %20 : vector<8x32xf32>
    %c32_i32 = arith.constant 32 : i32
    %22 = vector.broadcast %c32_i32 : i32 to vector<8x32xi32>
    %23 = arith.select %21, %3, %22 : vector<8x32xi1>, vector<8x32xi32>
    %cst_6 = arith.constant dense<2147483647> : vector<8xi32>
    %24 = vector.multi_reduction <minsi>, %23, %cst_6 [1] : vector<8x32xi32> to vector<8xi32>
    %25 = vector.shape_cast %24 : vector<8xi32> to vector<8x1xi32>
    %26 = vector.broadcast %25 : vector<8x1xi32> to vector<8x32xi32>
    %27 = arith.cmpi eq, %3, %26 : vector<8x32xi32>
    %cst_7 = arith.constant -1.000000e+30 : f32
    %28 = vector.broadcast %cst_7 : f32 to vector<8x32xf32>
    %29 = arith.select %27, %28, %11 : vector<8x32xi1>, vector<8x32xf32>
    %cst_8 = arith.constant dense<0xFF800000> : vector<8xf32>
    %30 = vector.multi_reduction <maximumf>, %29, %cst_8 [1] : vector<8x32xf32> to vector<8xf32>
    %31 = vector.shape_cast %30 : vector<8xf32> to vector<8x1xf32>
    %32 = arith.subf %31, %14 : vector<8x1xf32>
    %33 = math.exp %32 : vector<8x1xf32>
    %34 = arith.addf %19, %33 : vector<8x1xf32>
    %35 = vector.broadcast %31 : vector<8x1xf32> to vector<8x32xf32>
    %36 = arith.cmpf oeq, %29, %35 : vector<8x32xf32>
    %c32_i32_9 = arith.constant 32 : i32
    %37 = vector.broadcast %c32_i32_9 : i32 to vector<8x32xi32>
    %38 = arith.select %36, %3, %37 : vector<8x32xi1>, vector<8x32xi32>
    %cst_10 = arith.constant dense<2147483647> : vector<8xi32>
    %39 = vector.multi_reduction <minsi>, %38, %cst_10 [1] : vector<8x32xi32> to vector<8xi32>
    %40 = vector.shape_cast %39 : vector<8xi32> to vector<8x1xi32>
    %41 = vector.broadcast %40 : vector<8x1xi32> to vector<8x32xi32>
    %42 = arith.cmpi eq, %3, %41 : vector<8x32xi32>
    %cst_11 = arith.constant -1.000000e+30 : f32
    %43 = vector.broadcast %cst_11 : f32 to vector<8x32xf32>
    %44 = arith.select %42, %43, %29 : vector<8x32xi1>, vector<8x32xf32>
    %cst_12 = arith.constant dense<0xFF800000> : vector<8xf32>
    %45 = vector.multi_reduction <maximumf>, %44, %cst_12 [1] : vector<8x32xf32> to vector<8xf32>
    %46 = vector.shape_cast %45 : vector<8xf32> to vector<8x1xf32>
    %47 = arith.subf %46, %14 : vector<8x1xf32>
    %48 = math.exp %47 : vector<8x1xf32>
    %49 = arith.addf %34, %48 : vector<8x1xf32>
    %50 = vector.broadcast %46 : vector<8x1xf32> to vector<8x32xf32>
    %51 = arith.cmpf oeq, %44, %50 : vector<8x32xf32>
    %c32_i32_13 = arith.constant 32 : i32
    %52 = vector.broadcast %c32_i32_13 : i32 to vector<8x32xi32>
    %53 = arith.select %51, %3, %52 : vector<8x32xi1>, vector<8x32xi32>
    %cst_14 = arith.constant dense<2147483647> : vector<8xi32>
    %54 = vector.multi_reduction <minsi>, %53, %cst_14 [1] : vector<8x32xi32> to vector<8xi32>
    %55 = vector.shape_cast %54 : vector<8xi32> to vector<8x1xi32>
    %56 = vector.broadcast %55 : vector<8x1xi32> to vector<8x32xi32>
    %57 = arith.cmpi eq, %3, %56 : vector<8x32xi32>
    %cst_15 = arith.constant -1.000000e+30 : f32
    %58 = vector.broadcast %cst_15 : f32 to vector<8x32xf32>
    %59 = arith.select %57, %58, %44 : vector<8x32xi1>, vector<8x32xf32>
    %cst_16 = arith.constant dense<0xFF800000> : vector<8xf32>
    %60 = vector.multi_reduction <maximumf>, %59, %cst_16 [1] : vector<8x32xf32> to vector<8xf32>
    %61 = vector.shape_cast %60 : vector<8xf32> to vector<8x1xf32>
    %62 = arith.subf %61, %14 : vector<8x1xf32>
    %63 = math.exp %62 : vector<8x1xf32>
    %64 = arith.addf %49, %63 : vector<8x1xf32>
    %65 = math.log %64 : vector<8x1xf32>
    %66 = arith.addf %65, %14 : vector<8x1xf32>
    %67 = arith.subf %66, %9 : vector<8x1xf32>
    %68 = tpu.iota {dimensions = array<i32: 0>} : vector<8x1xi32>
    %69 = vector.broadcast %0 : i32 to vector<8x1xi32>
    %70 = arith.addi %68, %69 : vector<8x1xi32>
    %c0_i32 = arith.constant 0 : i32
    %71 = vector.broadcast %c0_i32 : i32 to vector<8x1xi32>
    %72 = arith.addi %70, %71 : vector<8x1xi32>
    %c8_i32_17 = arith.constant 8 : i32
    %73 = vector.broadcast %c8_i32_17 : i32 to vector<8x1xi32>
    %74 = arith.cmpi slt, %72, %73 : vector<8x1xi32>
    %cst_18 = arith.constant 0.000000e+00 : f32
    %75 = vector.broadcast %cst_18 : f32 to vector<8x1xf32>
    %76 = arith.select %74, %67, %75 : vector<8x1xi1>, vector<8x1xf32>
    %77 = vector.shape_cast %76 : vector<8x1xf32> to vector<1x8x1xf32>
    %cst_19 = arith.constant dense<0.000000e+00> : vector<1xf32>
    %78 = vector.multi_reduction <add>, %77, %cst_19 [1, 2] : vector<1x8x1xf32> to vector<1xf32>
    %79 = vector.shape_cast %78 : vector<1xf32> to vector<1x1x1xf32>
    %80 = vector.extract %79[0, 0, 0] : f32 from vector<1x1x1xf32>
    %81 = vector.broadcast %80 : f32 to vector<1x1xf32>
    %82 = vector.shape_cast %81 : vector<1x1xf32> to vector<1x1xf32>
    %83 = vector.broadcast %82 : vector<1x1xf32> to vector<8x128xf32>
    %c0_20 = arith.constant 0 : index
    %c0_21 = arith.constant 0 : index
    %84 = vector.load %arg3[%c0_20, %c0_21] : memref<8x128xf32, #tpu.memory_space<vmem>>, vector<8x128xf32>
    tpu.vector_store %arg3[%c0_20, %c0_21], %83 {strides = array<i32>} : memref<8x128xf32, #tpu.memory_space<vmem>>, vector<8x128xf32>,
    return
  }
  func.func @transform_0(%arg0: i32) -> (i32, i32) {
    %c0_i32 = arith.constant 0 : i32
    %c0_i32_0 = arith.constant 0 : i32
    return %arg0, %c0_i32 : i32, i32
  }
  func.func @transform_1(%arg0: i32) -> (i32, i32) {
    %c0_i32 = arith.constant 0 : i32
    %c0_i32_0 = arith.constant 0 : i32
    return %arg0, %c0_i32 : i32, i32
  }
  func.func @transform_2(%arg0: i32) -> (i32, i32) {
    %c0_i32 = arith.constant 0 : i32
    %c0_i32_0 = arith.constant 0 : i32
    return %arg0, %c0_i32 : i32, i32
  }
}

</mosaic_0001>

<llo_original>
// kernel: tpu_custom_call.1
$region0: #{tpu_custom_call.1}
  #allocation0 [shape = 'u32[]', space=smem, size = 0x4, offset = 0x4, fixed_abs, tag = 'smem constant byte address 0x4 - core index']
  #allocation1 [shape = 'u32[144,128]{1,0:T(1,128)}', space=vmem, size = 0x12000, scoped, tag = 'internal scratch']
  %s0 = inlined_call_operand.vmem [shape: f32[8,32], index: 0, kind: input, shape index: {}]
  %s1 = inlined_call_operand.vmem [shape: s32[8,1], index: 1, kind: input, shape index: {}]
  %s2 = inlined_call_operand.hbm [shape: f32[8,128], index: 2, kind: output, shape index: {}]
  %s3 = sld [smem:[#allocation0]]
  $region18: #{tpu_custom_call.1} parent=0
    _
  %s5 = ssub.s32 1, %s3
  %s6 = scalar_select 0, %s5, %s3
  $region1: #{tpu_custom_call.1} parent=0
    #allocation2 [shape = 'u8[4096]{0}', space=vmem, size = 0x1000, scoped, tag = 'output window, operand 0, single buffered']
    #allocation3 [shape = 's32[1]{0}', space=sflag, size = 0x4, scoped, tag = 'scoped memory for tpu_custom_call.1']
    %7 = vsyncpa [#allocation3], 0
    // Predicated region
    $region2: #{tpu_custom_call.1} parent=1 // pred_check
      _
    $region3: #{tpu_custom_call.1} parent=1 // pred_check_branch
      %9 = sbr.rel (0) target = $region5
    $region4: #{tpu_custom_call.1} parent=1 // pred_region
      _
    $region5: #{tpu_custom_call.1} parent=1 // pred_fallthru
      _
    // Predicated region
    $region6: #{tpu_custom_call.1} parent=1 // pred_check
      _
    $region7: #{tpu_custom_call.1} parent=1 // pred_check_branch
      %11 = sbr.rel (0) target = $region9
    $region8: #{tpu_custom_call.1} parent=1 // pred_region
      _
    $region9: #{tpu_custom_call.1} parent=1 // pred_fallthru
      _
    %s12 = smul.u32 0, 8
    %v13 = vld [vmem:[%s0] sm:$0xff]
    %v14 = vld [vmem:[%s1] sm:$0xff]
    %v15 = vlaneseq
    %v16 = vand.u32 %v15, 127
    %17 = vset.pattern.permute.xlu0 0
    %18 = vperm.xlu0 %17, %v14
    %v19 = vpop.permute.xlu0 %18
    %vm20 = vcmp.eq.s32.totalorder %v16, %v19
    %v21 = vsel %vm20, %v13, -1e+30
    %vm22 = vcmask 261120
    %v23 = vsel %vm22, %v21, -inf
    %24 = vmax.xlane.f32.xlu0 %v23
    %v25 = vpop.xlane.xlu0 %24
    %v26 = vsel %vm20, -1e+30, %v13
    %v27 = vsel %vm22, %v26, -inf
    %28 = vmax.xlane.f32.xlu0 %v27
    %v29 = vpop.xlane.xlu0 %28
    %v30 = vmax.f32 %v25, %v29
    %v31 = vsub.f32 %v25, %v30
    %v32 = vmul.f32 %v31, 1.442695
    %v33 = vpow.pop %v32
    %v34 = vsub.f32 %v29, %v30
    %v35 = vmul.f32 %v34, 1.442695
    %v36 = vpow.pop %v35
    %v37 = vadd.f32 %v33, %v36
    %vm38 = vcmp.eq.f32.partialorder %v26, %v29
    %v39 = vsel %vm38, %v16, 32
    %v40 = vsel %vm22, %v39, 2147483647
    %v41 = vand.u32 %v40, 65535
    %v42 = vshra.s32 %v40, 16
    %v43 = vcvt.s32.f32 %v41
    %v44 = vcvt.s32.f32 %v42
    %45 = vmin.xlane.f32.xlu0 %v44
    %v46 = vpop.xlane.xlu0 %45
    %vm47 = vcmp.eq.f32.partialorder %v44, %v46
    %v48 = vsel %vm47, %v43, inf
    %49 = vmin.xlane.f32.xlu0 %v48
    %v50 = vpop.xlane.xlu0 %49
    %v51 = vcvt.f32.s32 %v50
    %v52 = vcvt.f32.s32 %v46
    %v53 = vshll.u32 %v52, 16
    %v54 = vadd.s32 %v53, %v51
    %vm55 = vcmp.eq.s32.totalorder %v16, %v54
    %v56 = vsel %vm55, -1e+30, %v26
    %v57 = vsel %vm22, %v56, -inf
    %58 = vmax.xlane.f32.xlu0 %v57
    %v59 = vpop.xlane.xlu0 %58
    %v60 = vsub.f32 %v59, %v30
    %v61 = vmul.f32 %v60, 1.442695
    %v62 = vpow.pop %v61
    %v63 = vadd.f32 %v37, %v62
    %vm64 = vcmp.eq.f32.partialorder %v56, %v59
    %v65 = vsel %vm64, %v16, 32
    %v66 = vsel %vm22, %v65, 2147483647
    %v67 = vand.u32 %v66, 65535
    %v68 = vshra.s32 %v66, 16
    %v69 = vcvt.s32.f32 %v67
    %v70 = vcvt.s32.f32 %v68
    %71 = vmin.xlane.f32.xlu0 %v70
    %v72 = vpop.xlane.xlu0 %71
    %vm73 = vcmp.eq.f32.partialorder %v70, %v72
    %v74 = vsel %vm73, %v69, inf
    %75 = vmin.xlane.f32.xlu0 %v74
    %v76 = vpop.xlane.xlu0 %75
    %v77 = vcvt.f32.s32 %v76
    %v78 = vcvt.f32.s32 %v72
    %v79 = vshll.u32 %v78, 16
    %v80 = vadd.s32 %v79, %v77
    %vm81 = vcmp.eq.s32.totalorder %v16, %v80
    %v82 = vsel %vm81, -1e+30, %v56
    %v83 = vsel %vm22, %v82, -inf
    %84 = vmax.xlane.f32.xlu0 %v83
    %v85 = vpop.xlane.xlu0 %84
    %v86 = vsub.f32 %v85, %v30
    %v87 = vmul.f32 %v86, 1.442695
    %v88 = vpow.pop %v87
    %v89 = vadd.f32 %v63, %v88
    %vm90 = vcmp.eq.f32.partialorder %v82, %v85
    %v91 = vsel %vm90, %v16, 32
    %v92 = vsel %vm22, %v91, 2147483647
    %v93 = vand.u32 %v92, 65535
    %v94 = vshra.s32 %v92, 16
    %v95 = vcvt.s32.f32 %v93
    %v96 = vcvt.s32.f32 %v94
    %97 = vmin.xlane.f32.xlu0 %v96
    %v98 = vpop.xlane.xlu0 %97
    %vm99 = vcmp.eq.f32.partialorder %v96, %v98
    %v100 = vsel %vm99, %v95, inf
    %101 = vmin.xlane.f32.xlu0 %v100
    %v102 = vpop.xlane.xlu0 %101
    %v103 = vcvt.f32.s32 %v102
    %v104 = vcvt.f32.s32 %v98
    %v105 = vshll.u32 %v104, 16
    %v106 = vadd.s32 %v105, %v103
    %vm107 = vcmp.eq.s32.totalorder %v16, %v106
    %v108 = vsel %vm107, -1e+30, %v82
    %v109 = vsel %vm22, %v108, -inf
    %110 = vmax.xlane.f32.xlu0 %v109
    %v111 = vpop.xlane.xlu0 %110
    %v112 = vsub.f32 %v111, %v30
    %v113 = vmul.f32 %v112, 1.442695
    %v114 = vpow.pop %v113
    %v115 = vadd.f32 %v89, %v114
    %v116 = vlog2.pop %v115
    %v117 = vmul.f32 %v116, 0.6931472
    %v118 = vadd.f32 %v117, %v30
    %v119 = vsub.f32 %v118, %v25
    %v120 = vlaneseq
    %v121 = vshrl.u32 %v120, 7
    %v122 = vstv %s12
    %v123 = vadd.s32 %v121, %v122
    %vm124 = vcmp.lt.s32.totalorder %v123, 8
    %v125 = vsel %vm124, %v119, 0.0
    %vm126 = vcmask 7168
    %v127 = vsel %vm126, %v125, 0.0
    %128 = vadd.xlane.f32.xlu0 %v127
    %v129 = vpop.xlane.xlu0 %128
    %v130 = vrot.slane %v129, 4
    %v131 = vadd.f32 %v129, %v130
    %v132 = vrot.slane %v131, 2
    %v133 = vadd.f32 %v131, %v132
    %v134 = vrot.slane %v133, 1
    %v135 = vadd.f32 %v133, %v134
    %s136 = vtos %v135
    %v137 = vstv %s136
    %138 = vst [vmem:[#allocation2] sm:$0xff] %v137
    // Predicated region
    $region10: #{tpu_custom_call.1} parent=1 // pred_check
      _
    $region11: #{tpu_custom_call.1} parent=1 // pred_check_branch
      %140 = sbr.rel (0) target = $region13
    $region12: #{tpu_custom_call.1} parent=1 // pred_region
      %s142 = ssub.s32 128, 128
      %143 = vsyncadd [#allocation3], %s142
      %s145 = sshll.u32 [#allocation2], 4
      %s146 = int_to_ptr.vmem [resolvable:$true] %s145
      %148 = dma.vmem_to_hbm [thread:$0]  %s146, 128, %s2, [#allocation3]
    $region13: #{tpu_custom_call.1} parent=1 // pred_fallthru
      _
    // Predicated region
    $region14: #{tpu_custom_call.1} parent=1 // pred_check
      _
    $region15: #{tpu_custom_call.1} parent=1 // pred_check_branch
      %150 = sbr.rel (0) target = $region17
    $region16: #{tpu_custom_call.1} parent=1 // pred_region
      %151 = dma.done [#allocation3], 128
    $region17: #{tpu_custom_call.1} parent=1 // pred_fallthru
      _
    %152 = vsyncpa [#allocation3], 1

</llo_original>
